<compile_context>
chip_gen: v5e
topology: v5e:2x2
jax: 0.10.0
libtpu: 0.0.40
codegen_flags: <defaults>
</compile_context>

<pallas_src>
import functools

import jax
import jax.numpy as jnp
from jax.experimental import pallas as pl
from jax.experimental.pallas import tpu as pltpu


_LANE = 128
_SUBLANE = 8
_NEG_FILL = -1e30


def _round_up(x, m):
    return (x + m - 1) // m * m


def _fc_logsoftmax_kernel(x_ref, w_ref, b_ref, o_ref):
    """o = log_softmax(x @ w + b); x:(tm,K) w:(K,Np) b:(1,Np) o:(tm,Np)."""
    logits = jnp.dot(x_ref[...], w_ref[...], preferred_element_type=jnp.float32)
    logits = logits + b_ref[...]
    m = jnp.max(logits, axis=-1, keepdims=True)
    s = logits - m
    lse = jnp.log(jnp.sum(jnp.exp(s), axis=-1, keepdims=True))
    o_ref[...] = (s - lse).astype(o_ref.dtype)


def pack_params(w, b):
    """One-time packing of PyTorch-layout fc1 params.

    w: (output_dim, input_dim), b: (output_dim,)  ->
    w_packed: (input_dim, Np), b_packed: (1, Np) with Np = round_up(out, 128).
    Padded weight columns are zero and padded bias entries are -1e30 so the
    padded logits vanish in the softmax normalizer.
    """
    out_dim, in_dim = w.shape
    np_ = _round_up(out_dim, _LANE)
    w_packed = jnp.zeros((in_dim, np_), jnp.float32)
    w_packed = w_packed.at[:, :out_dim].set(w.T.astype(jnp.float32))
    b_packed = jnp.full((1, np_), _NEG_FILL, jnp.float32)
    b_packed = b_packed.at[0, :out_dim].set(b.astype(jnp.float32))
    return w_packed, b_packed


def _pick_tm(mp):
    """Largest row-tile <= 512 that divides mp (mp is a multiple of 8)."""
    if mp <= 512:
        return mp
    for t in (512, 256, 128, 64, 32, 16, 8):
        if mp % t == 0:
            return t
    return mp


@functools.partial(jax.jit, static_argnames=("num_classes",))
def mclr_forward(w_packed, b_packed, x, *, num_classes):
    """log_softmax(flatten(x) @ W^T + b), fused in one Pallas kernel."""
    n = x.shape[0]
    xf = x.reshape(n, -1).astype(jnp.float32)
    k = xf.shape[1]
    kp, np_ = w_packed.shape
    assert k == kp, f"flattened input dim {k} != packed weight dim {kp}"

    mp = _round_up(max(n, 1), _SUBLANE)
    if mp != n:
        xf = jnp.pad(xf, ((0, mp - n), (0, 0)))
    tm = _pick_tm(mp)
    grid = (mp // tm,)

    out = pl.pallas_call(
        _fc_logsoftmax_kernel,
        out_shape=jax.ShapeDtypeStruct((mp, np_), jnp.float32),
        grid=grid,
        in_specs=[
            pl.BlockSpec((tm, k), lambda i: (i, 0)),
            pl.BlockSpec((kp, np_), lambda i: (0, 0)),   # weights resident
            pl.BlockSpec((1, np_), lambda i: (0, 0)),    # bias resident
        ],
        out_specs=pl.BlockSpec((tm, np_), lambda i: (i, 0)),
        compiler_params=pltpu.CompilerParams(
            dimension_semantics=("parallel",)),
    )(xf, w_packed, b_packed)
    return out[:n, :num_classes]


# ----------------------------------------------------------------------------
# Pure-JAX reference for the correctness check
# ----------------------------------------------------------------------------
def mclr_ref(w, b, x):
    xf = x.reshape(x.shape[0], -1)
    logits = jnp.dot(xf, w.T, precision=jax.lax.Precision.HIGHEST) + b
    return jax.nn.log_softmax(logits, axis=1)


if __name__ == "__main__":
    input_dim, output_dim = 784, 62     # Mclr_Logistic defaults (28x28 -> 62)
    batch = 8

    key = jax.random.PRNGKey(0)
    wk, bk, xk = jax.random.split(key, 3)
    bound = 1.0 / jnp.sqrt(jnp.float32(input_dim))      # nn.Linear default init
    w = jax.random.uniform(wk, (output_dim, input_dim), jnp.float32, -bound, bound)
    b = jax.random.uniform(bk, (output_dim,), jnp.float32, -bound, bound)
    x = jax.random.normal(xk, (batch, 1, 28, 28), jnp.float32)

    w_packed, b_packed = pack_params(w, b)              # one-time packing
    out = mclr_forward(w_packed, b_packed, x, num_classes=output_dim)
    out = jax.block_until_ready(out)

    ref = mclr_ref(w, b, x)
    ok = (
        out.shape == (batch, output_dim)
        and bool(jnp.all(jnp.isfinite(out)))
        and bool(jnp.allclose(out, ref, atol=5e-3, rtol=5e-3))
    )
    if ok:
        print("KERNEL_OK")
    else:
        print("MISMATCH max_abs_err=", float(jnp.max(jnp.abs(out - ref))))
</pallas_src>

<mosaic_0001>
module attributes {stable_mosaic.version = 11 : i64} {
  func.func @_fc_logsoftmax_kernel(%arg0: i32, %arg1: memref<8x784xf32, #tpu.memory_space<vmem>>, %arg2: memref<784x128xf32, #tpu.memory_space<vmem>>, %arg3: memref<1x128xf32, #tpu.memory_space<vmem>>, %arg4: memref<8x128xf32, #tpu.memory_space<vmem>>) attributes {dimension_semantics = [#tpu.dimension_semantics<parallel>], iteration_bounds = array<i64: 1>, scalar_prefetch = 0 : i64, scratch_operands = 0 : i64, tpu.core_type = #tpu.core_type<tc>, window_params = [{transform_indices = @transform_0, window_bounds = array<i64: 8, 784>}, {pipeline_mode = #tpu.pipeline_mode<synchronous>, transform_indices = @transform_1, window_bounds = array<i64: 784, 128>}, {pipeline_mode = #tpu.pipeline_mode<synchronous>, transform_indices = @transform_2, window_bounds = array<i64: 1, 128>}, {transform_indices = @transform_3, window_bounds = array<i64: 8, 128>}]} {
    %c0 = arith.constant 0 : index
    %c0_0 = arith.constant 0 : index
    %0 = vector.load %arg1[%c0, %c0_0] : memref<8x784xf32, #tpu.memory_space<vmem>>, vector<8x784xf32>
    %c0_1 = arith.constant 0 : index
    %c0_2 = arith.constant 0 : index
    %1 = vector.load %arg2[%c0_1, %c0_2] : memref<784x128xf32, #tpu.memory_space<vmem>>, vector<784x128xf32>
    %cst = arith.constant dense<0.000000e+00> : vector<8x128xf32>
    %2 = tpu.matmul %0, %1, %cst {dimension_numbers = #tpu.dot_dimension_numbers<[1], [0], [0], [1], [0, 0, 1, 1], [], []>} : vector<8x784xf32>, vector<784x128xf32>, vector<8x128xf32> -> vector<8x128xf32>
    %c0_3 = arith.constant 0 : index
    %c0_4 = arith.constant 0 : index
    %3 = vector.load %arg3[%c0_3, %c0_4] : memref<1x128xf32, #tpu.memory_space<vmem>>, vector<1x128xf32>
    %4 = vector.broadcast %3 : vector<1x128xf32> to vector<8x128xf32>
    %5 = arith.addf %2, %4 : vector<8x128xf32>
    %cst_5 = arith.constant dense<0xFF800000> : vector<8xf32>
    %6 = vector.multi_reduction <maximumf>, %5, %cst_5 [1] : vector<8x128xf32> to vector<8xf32>
    %7 = vector.shape_cast %6 : vector<8xf32> to vector<8x1xf32>
    %8 = vector.broadcast %7 : vector<8x1xf32> to vector<8x128xf32>
    %9 = arith.subf %5, %8 : vector<8x128xf32>
    %10 = math.exp %9 : vector<8x128xf32>
    %cst_6 = arith.constant dense<0.000000e+00> : vector<8xf32>
    %11 = vector.multi_reduction <add>, %10, %cst_6 [1] : vector<8x128xf32> to vector<8xf32>
    %12 = vector.shape_cast %11 : vector<8xf32> to vector<8x1xf32>
    %13 = math.log %12 : vector<8x1xf32>
    %14 = vector.broadcast %13 : vector<8x1xf32> to vector<8x128xf32>
    %15 = arith.subf %9, %14 : vector<8x128xf32>
    %c0_7 = arith.constant 0 : index
    %c0_8 = arith.constant 0 : index
    %16 = vector.load %arg4[%c0_7, %c0_8] : memref<8x128xf32, #tpu.memory_space<vmem>>, vector<8x128xf32>
    tpu.vector_store %arg4[%c0_7, %c0_8], %15 {strides = array<i32>} : memref<8x128xf32, #tpu.memory_space<vmem>>, vector<8x128xf32>,
    return
  }
  func.func @transform_0(%arg0: i32) -> (i32, i32) {
    %c0_i32 = arith.constant 0 : i32
    %c0_i32_0 = arith.constant 0 : i32
    return %arg0, %c0_i32 : i32, i32
  }
  func.func @transform_1(%arg0: i32) -> (i32, i32) {
    %c0_i32 = arith.constant 0 : i32
    %c0_i32_0 = arith.constant 0 : i32
    %c0_i32_1 = arith.constant 0 : i32
    return %c0_i32, %c0_i32_0 : i32, i32
  }
  func.func @transform_2(%arg0: i32) -> (i32, i32) {
    %c0_i32 = arith.constant 0 : i32
    %c0_i32_0 = arith.constant 0 : i32
    %c0_i32_1 = arith.constant 0 : i32
    return %c0_i32, %c0_i32_0 : i32, i32
  }
  func.func @transform_3(%arg0: i32) -> (i32, i32) {
    %c0_i32 = arith.constant 0 : i32
    %c0_i32_0 = arith.constant 0 : i32
    return %arg0, %c0_i32 : i32, i32
  }
}

</mosaic_0001>

<llo_original>
// kernel: mclr_forward.1
$region0: #{mclr_forward.1}
  #allocation0 [shape = 'u32[]', space=smem, size = 0x4, offset = 0x4, fixed_abs, tag = 'smem constant byte address 0x4 - core index']
  #allocation1 [shape = 'u32[72,128]{1,0:T(1,128)}', space=vmem, size = 0x9000, scoped, tag = 'internal scratch']
  %s0 = inlined_call_operand.vmem [shape: f32[8,784], index: 0, kind: input, shape index: {}]
  %s1 = inlined_call_operand.vmem [shape: f32[784,128], index: 1, kind: input, shape index: {}]
  %s2 = inlined_call_operand.vmem [shape: f32[1,128], index: 2, kind: input, shape index: {}]
  %s3 = inlined_call_operand.hbm [shape: f32[8,128], index: 3, kind: output, shape index: {}]
  %s4 = sld [smem:[#allocation0]]
  $region22: #{mclr_forward.1} parent=0
    _
  %s6 = ssub.s32 1, %s4
  %s7 = scalar_select 0, %s6, %s4
  $region1: #{mclr_forward.1} parent=0
    #allocation2 [shape = 'u8[4096]{0}', space=vmem, size = 0x1000, scoped, tag = 'output window, operand 0, single buffered']
    #allocation3 [shape = 's32[1]{0}', space=sflag, size = 0x4, scoped, tag = 'scoped memory for mclr_forward.1']
    %8 = vsyncpa [#allocation3], 0
    // Predicated region
    $region2: #{mclr_forward.1} parent=1 // pred_check
      _
    $region3: #{mclr_forward.1} parent=1 // pred_check_branch
      %10 = sbr.rel (0) target = $region5
    $region4: #{mclr_forward.1} parent=1 // pred_region
      _
    $region5: #{mclr_forward.1} parent=1 // pred_fallthru
      _
    // Predicated region
    $region6: #{mclr_forward.1} parent=1 // pred_check
      _
    $region7: #{mclr_forward.1} parent=1 // pred_check_branch
      %12 = sbr.rel (0) target = $region9
    $region8: #{mclr_forward.1} parent=1 // pred_region
      _
    $region9: #{mclr_forward.1} parent=1 // pred_fallthru
      _
    // Predicated region
    $region10: #{mclr_forward.1} parent=1 // pred_check
      _
    $region11: #{mclr_forward.1} parent=1 // pred_check_branch
      %14 = sbr.rel (0) target = $region13
    $region12: #{mclr_forward.1} parent=1 // pred_region
      _
    $region13: #{mclr_forward.1} parent=1 // pred_fallthru
      _
    %v15 = vld [vmem:[%s0] sm:$0xff]
    %v16 = vld [vmem:[%s0 + $0x8] sm:$0xff]
    %v17 = vld [vmem:[%s0 + $0x10] sm:$0xff]
    %v18 = vld [vmem:[%s0 + $0x18] sm:$0xff]
    %v19 = vld [vmem:[%s0 + $0x20] sm:$0xff]
    %v20 = vld [vmem:[%s0 + $0x28] sm:$0xff]
    %v21 = vld [vmem:[%s0 + $0x30] sm:$0xff]
    %v22 = vld [vmem:[%s1] sm:$0xff]
    %v23 = vld [vmem:[%s1 + $0x8] sm:$0xff]
    %v24 = vld [vmem:[%s1 + $0x10] sm:$0xff]
    %v25 = vld [vmem:[%s1 + $0x18] sm:$0xff]
    %v26 = vld [vmem:[%s1 + $0x20] sm:$0xff]
    %v27 = vld [vmem:[%s1 + $0x28] sm:$0xff]
    %v28 = vld [vmem:[%s1 + $0x30] sm:$0xff]
    %v29 = vld [vmem:[%s1 + $0x38] sm:$0xff]
    %v30 = vld [vmem:[%s1 + $0x40] sm:$0xff]
    %v31 = vld [vmem:[%s1 + $0x48] sm:$0xff]
    %v32 = vld [vmem:[%s1 + $0x50] sm:$0xff]
    %v33 = vld [vmem:[%s1 + $0x58] sm:$0xff]
    %v34 = vld [vmem:[%s1 + $0x60] sm:$0xff]
    %v35 = vld [vmem:[%s1 + $0x68] sm:$0xff]
    %v36 = vld [vmem:[%s1 + $0x70] sm:$0xff]
    %v37 = vld [vmem:[%s1 + $0x78] sm:$0xff]
    %v38 = vld [vmem:[%s1 + $0x80] sm:$0xff]
    %v39 = vld [vmem:[%s1 + $0x88] sm:$0xff]
    %v40 = vld [vmem:[%s1 + $0x90] sm:$0xff]
    %v41 = vld [vmem:[%s1 + $0x98] sm:$0xff]
    %v42 = vld [vmem:[%s1 + $0xa0] sm:$0xff]
    %v43 = vld [vmem:[%s1 + $0xa8] sm:$0xff]
    %v44 = vld [vmem:[%s1 + $0xb0] sm:$0xff]
    %v45 = vld [vmem:[%s1 + $0xb8] sm:$0xff]
    %v46 = vld [vmem:[%s1 + $0xc0] sm:$0xff]
    %v47 = vld [vmem:[%s1 + $0xc8] sm:$0xff]
    %v48 = vld [vmem:[%s1 + $0xd0] sm:$0xff]
    %v49 = vld [vmem:[%s1 + $0xd8] sm:$0xff]
    %v50 = vld [vmem:[%s1 + $0xe0] sm:$0xff]
    %v51 = vld [vmem:[%s1 + $0xe8] sm:$0xff]
    %v52 = vld [vmem:[%s1 + $0xf0] sm:$0xff]
    %v53 = vld [vmem:[%s1 + $0xf8] sm:$0xff]
    %v54 = vld [vmem:[%s1 + $0x100] sm:$0xff]
    %v55 = vld [vmem:[%s1 + $0x108] sm:$0xff]
    %v56 = vld [vmem:[%s1 + $0x110] sm:$0xff]
    %v57 = vld [vmem:[%s1 + $0x118] sm:$0xff]
    %v58 = vld [vmem:[%s1 + $0x120] sm:$0xff]
    %v59 = vld [vmem:[%s1 + $0x128] sm:$0xff]
    %v60 = vld [vmem:[%s1 + $0x130] sm:$0xff]
    %v61 = vld [vmem:[%s1 + $0x138] sm:$0xff]
    %v62 = vld [vmem:[%s1 + $0x140] sm:$0xff]
    %v63 = vld [vmem:[%s1 + $0x148] sm:$0xff]
    %v64 = vld [vmem:[%s1 + $0x150] sm:$0xff]
    %v65 = vld [vmem:[%s1 + $0x158] sm:$0xff]
    %v66 = vld [vmem:[%s1 + $0x160] sm:$0xff]
    %v67 = vld [vmem:[%s1 + $0x168] sm:$0xff]
    %v68 = vld [vmem:[%s1 + $0x170] sm:$0xff]
    %v69 = vld [vmem:[%s1 + $0x178] sm:$0xff]
    %v70 = vld [vmem:[%s1 + $0x180] sm:$0xff]
    %v71 = vld [vmem:[%s1 + $0x188] sm:$0xff]
    %v72 = vld [vmem:[%s1 + $0x190] sm:$0xff]
    %v73 = vld [vmem:[%s1 + $0x198] sm:$0xff]
    %v74 = vld [vmem:[%s1 + $0x1a0] sm:$0xff]
    %v75 = vld [vmem:[%s1 + $0x1a8] sm:$0xff]
    %v76 = vld [vmem:[%s1 + $0x1b0] sm:$0xff]
    %v77 = vld [vmem:[%s1 + $0x1b8] sm:$0xff]
    %v78 = vld [vmem:[%s1 + $0x1c0] sm:$0xff]
    %v79 = vld [vmem:[%s1 + $0x1c8] sm:$0xff]
    %v80 = vld [vmem:[%s1 + $0x1d0] sm:$0xff]
    %v81 = vld [vmem:[%s1 + $0x1d8] sm:$0xff]
    %v82 = vld [vmem:[%s1 + $0x1e0] sm:$0xff]
    %v83 = vld [vmem:[%s1 + $0x1e8] sm:$0xff]
    %v84 = vld [vmem:[%s1 + $0x1f0] sm:$0xff]
    %v85 = vld [vmem:[%s1 + $0x1f8] sm:$0xff]
    %v86 = vld [vmem:[%s1 + $0x200] sm:$0xff]
    %v87 = vld [vmem:[%s1 + $0x208] sm:$0xff]
    %v88 = vld [vmem:[%s1 + $0x210] sm:$0xff]
    %v89 = vld [vmem:[%s1 + $0x218] sm:$0xff]
    %v90 = vld [vmem:[%s1 + $0x220] sm:$0xff]
    %v91 = vld [vmem:[%s1 + $0x228] sm:$0xff]
    %v92 = vld [vmem:[%s1 + $0x230] sm:$0xff]
    %v93 = vld [vmem:[%s1 + $0x238] sm:$0xff]
    %v94 = vld [vmem:[%s1 + $0x240] sm:$0xff]
    %v95 = vld [vmem:[%s1 + $0x248] sm:$0xff]
    %v96 = vld [vmem:[%s1 + $0x250] sm:$0xff]
    %v97 = vld [vmem:[%s1 + $0x258] sm:$0xff]
    %v98 = vld [vmem:[%s1 + $0x260] sm:$0xff]
    %v99 = vld [vmem:[%s1 + $0x268] sm:$0xff]
    %v100 = vld [vmem:[%s1 + $0x270] sm:$0xff]
    %v101 = vld [vmem:[%s1 + $0x278] sm:$0xff]
    %v102 = vld [vmem:[%s1 + $0x280] sm:$0xff]
    %v103 = vld [vmem:[%s1 + $0x288] sm:$0xff]
    %v104 = vld [vmem:[%s1 + $0x290] sm:$0xff]
    %v105 = vld [vmem:[%s1 + $0x298] sm:$0xff]
    %v106 = vld [vmem:[%s1 + $0x2a0] sm:$0xff]
    %v107 = vld [vmem:[%s1 + $0x2a8] sm:$0xff]
    %v108 = vld [vmem:[%s1 + $0x2b0] sm:$0xff]
    %v109 = vld [vmem:[%s1 + $0x2b8] sm:$0xff]
    %v110 = vld [vmem:[%s1 + $0x2c0] sm:$0xff]
    %v111 = vld [vmem:[%s1 + $0x2c8] sm:$0xff]
    %v112 = vld [vmem:[%s1 + $0x2d0] sm:$0xff]
    %v113 = vld [vmem:[%s1 + $0x2d8] sm:$0xff]
    %v114 = vld [vmem:[%s1 + $0x2e0] sm:$0xff]
    %v115 = vld [vmem:[%s1 + $0x2e8] sm:$0xff]
    %v116 = vld [vmem:[%s1 + $0x2f0] sm:$0xff]
    %v117 = vld [vmem:[%s1 + $0x2f8] sm:$0xff]
    %v118 = vld [vmem:[%s1 + $0x300] sm:$0xff]
    %v119 = vld [vmem:[%s1 + $0x308] sm:$0xff]
    %v120 = vld [vmem:[%s2] sm:$0x1]
    %v122 = vperm.slane %v120, 0
    %vm124 = vcmask 130048
    %v126 = vsel %vm124, %v21, 0
    %128 = vmatpush.msra.mxu0 %v37
    %129 = vmatpush.msra.mxu0 %v36
    %130 = vmatpush.msra.mxu0 %v35
    %131 = vmatpush.msra.mxu0 %v34
    %132 = vmatpush.msra.mxu0 %v33
    %133 = vmatpush.msra.mxu0 %v32
    %134 = vmatpush.msra.mxu0 %v31
    %135 = vmatpush.msra.mxu0 %v30
    %136 = vmatpush.msra.mxu0 %v29
    %137 = vmatpush.msra.mxu0 %v28
    %138 = vmatpush.msra.mxu0 %v27
    %139 = vmatpush.msra.mxu0 %v26
    %140 = vmatpush.msra.mxu0 %v25
    %141 = vmatpush.msra.mxu0 %v24
    %142 = vmatpush.msra.mxu0 %v23
    %143 = vmatpush.msra.mxu0 %v22
    %144 = vmatmul.f32.gmra.mxu0 %v15
    %v145 = vpop.f32.mrf.mxu0
    %v146 = vadd.f32 %v122, %v145
    %147 = vdwg.mxu0
    %148 = vmatpush.msra.mxu0 %v53
    %149 = vmatpush.msra.mxu0 %v52
    %150 = vmatpush.msra.mxu0 %v51
    %151 = vmatpush.msra.mxu0 %v50
    %152 = vmatpush.msra.mxu0 %v49
    %153 = vmatpush.msra.mxu0 %v48
    %154 = vmatpush.msra.mxu0 %v47
    %155 = vmatpush.msra.mxu0 %v46
    %156 = vmatpush.msra.mxu0 %v45
    %157 = vmatpush.msra.mxu0 %v44
    %158 = vmatpush.msra.mxu0 %v43
    %159 = vmatpush.msra.mxu0 %v42
    %160 = vmatpush.msra.mxu0 %v41
    %161 = vmatpush.msra.mxu0 %v40
    %162 = vmatpush.msra.mxu0 %v39
    %163 = vmatpush.msra.mxu0 %v38
    %164 = vmatmul.f32.gmra.mxu0 %v16
    %v165 = vpop.f32.mrf.mxu0
    %v166 = vadd.f32 %v146, %v165
    %167 = vdwg.mxu0
    %168 = vmatpush.msra.mxu0 %v69
    %169 = vmatpush.msra.mxu0 %v68
    %170 = vmatpush.msra.mxu0 %v67
    %171 = vmatpush.msra.mxu0 %v66
    %172 = vmatpush.msra.mxu0 %v65
    %173 = vmatpush.msra.mxu0 %v64
    %174 = vmatpush.msra.mxu0 %v63
    %175 = vmatpush.msra.mxu0 %v62
    %176 = vmatpush.msra.mxu0 %v61
    %177 = vmatpush.msra.mxu0 %v60
    %178 = vmatpush.msra.mxu0 %v59
    %179 = vmatpush.msra.mxu0 %v58
    %180 = vmatpush.msra.mxu0 %v57
    %181 = vmatpush.msra.mxu0 %v56
    %182 = vmatpush.msra.mxu0 %v55
    %183 = vmatpush.msra.mxu0 %v54
    %184 = vmatmul.f32.gmra.mxu0 %v17
    %v185 = vpop.f32.mrf.mxu0
    %v186 = vadd.f32 %v166, %v185
    %187 = vdwg.mxu0
    %188 = vmatpush.msra.mxu0 %v85
    %189 = vmatpush.msra.mxu0 %v84
    %190 = vmatpush.msra.mxu0 %v83
    %191 = vmatpush.msra.mxu0 %v82
    %192 = vmatpush.msra.mxu0 %v81
    %193 = vmatpush.msra.mxu0 %v80
    %194 = vmatpush.msra.mxu0 %v79
    %195 = vmatpush.msra.mxu0 %v78
    %196 = vmatpush.msra.mxu0 %v77
    %197 = vmatpush.msra.mxu0 %v76
    %198 = vmatpush.msra.mxu0 %v75
    %199 = vmatpush.msra.mxu0 %v74
    %200 = vmatpush.msra.mxu0 %v73
    %201 = vmatpush.msra.mxu0 %v72
    %202 = vmatpush.msra.mxu0 %v71
    %203 = vmatpush.msra.mxu0 %v70
    %204 = vmatmul.f32.gmra.mxu0 %v18
    %v205 = vpop.f32.mrf.mxu0
    %v206 = vadd.f32 %v186, %v205
    %207 = vdwg.mxu0
    %208 = vmatpush.msra.mxu0 %v101
    %209 = vmatpush.msra.mxu0 %v100
    %210 = vmatpush.msra.mxu0 %v99
    %211 = vmatpush.msra.mxu0 %v98
    %212 = vmatpush.msra.mxu0 %v97
    %213 = vmatpush.msra.mxu0 %v96
    %214 = vmatpush.msra.mxu0 %v95
    %215 = vmatpush.msra.mxu0 %v94
    %216 = vmatpush.msra.mxu0 %v93
    %217 = vmatpush.msra.mxu0 %v92
    %218 = vmatpush.msra.mxu0 %v91
    %219 = vmatpush.msra.mxu0 %v90
    %220 = vmatpush.msra.mxu0 %v89
    %221 = vmatpush.msra.mxu0 %v88
    %222 = vmatpush.msra.mxu0 %v87
    %223 = vmatpush.msra.mxu0 %v86
    %224 = vmatmul.f32.gmra.mxu0 %v19
    %v225 = vpop.f32.mrf.mxu0
    %v226 = vadd.f32 %v206, %v225
    %227 = vdwg.mxu0
    %228 = vmatpush.msra.mxu0 %v117
    %229 = vmatpush.msra.mxu0 %v116
    %230 = vmatpush.msra.mxu0 %v115
    %231 = vmatpush.msra.mxu0 %v114
    %232 = vmatpush.msra.mxu0 %v113
    %233 = vmatpush.msra.mxu0 %v112
    %234 = vmatpush.msra.mxu0 %v111
    %235 = vmatpush.msra.mxu0 %v110
    %236 = vmatpush.msra.mxu0 %v109
    %237 = vmatpush.msra.mxu0 %v108
    %238 = vmatpush.msra.mxu0 %v107
    %239 = vmatpush.msra.mxu0 %v106
    %240 = vmatpush.msra.mxu0 %v105
    %241 = vmatpush.msra.mxu0 %v104
    %242 = vmatpush.msra.mxu0 %v103
    %243 = vmatpush.msra.mxu0 %v102
    %244 = vmatmul.f32.gmra.mxu0 %v20
    %v245 = vpop.f32.mrf.mxu0
    %v246 = vadd.f32 %v226, %v245
    %247 = vdwg.mxu0
    %248 = vmatpush.msra.mxu0 0.0
    %249 = vmatpush.msra.mxu0 0.0
    %250 = vmatpush.msra.mxu0 0.0
    %251 = vmatpush.msra.mxu0 0.0
    %252 = vmatpush.msra.mxu0 0.0
    %253 = vmatpush.msra.mxu0 0.0
    %254 = vmatpush.msra.mxu0 0.0
    %255 = vmatpush.msra.mxu0 0.0
    %256 = vmatpush.msra.mxu0 0.0
    %257 = vmatpush.msra.mxu0 0.0
    %258 = vmatpush.msra.mxu0 0.0
    %259 = vmatpush.msra.mxu0 0.0
    %260 = vmatpush.msra.mxu0 0.0
    %261 = vmatpush.msra.mxu0 0.0
    %262 = vmatpush.msra.mxu0 %v119
    %263 = vmatpush.msra.mxu0 %v118
    %264 = vmatmul.f32.gmra.mxu0 %v126
    %v265 = vpop.f32.mrf.mxu0
    %v266 = vadd.f32 %v246, %v265
    %267 = vdwg.mxu0
    %268 = vmax.xlane.f32.xlu0 %v266
    %v269 = vpop.xlane.xlu0 %268
    %v270 = vsub.f32 %v266, %v269
    %v271 = vmul.f32 %v270, 1.442695
    %v272 = vpow.pop %v271
    %273 = vadd.xlane.f32.xlu0 %v272
    %v274 = vpop.xlane.xlu0 %273
    %v275 = vlog2.pop %v274
    %v276 = vmul.f32 %v275, 0.6931472
    %v277 = vsub.f32 %v270, %v276
    %278 = vst [vmem:[#allocation2] sm:$0xff] %v277
    // Predicated region
    $region14: #{mclr_forward.1} parent=1 // pred_check
      _
    $region15: #{mclr_forward.1} parent=1 // pred_check_branch
      %280 = sbr.rel (0) target = $region17
    $region16: #{mclr_forward.1} parent=1 // pred_region
      %282 = vsyncadd [#allocation3], 0
      %s284 = sshll.u32 [#allocation2], 4
      %s285 = int_to_ptr.vmem [resolvable:$true] %s284
      %s286 = sshll.u32 %s3, 4
      %s287 = int_to_ptr.hbm [resolvable:$true] %s286
      %289 = dma.vmem_to_hbm [thread:$0]  %s285, 128, %s287, [#allocation3]
    $region17: #{mclr_forward.1} parent=1 // pred_fallthru
      _
    // Predicated region
    $region18: #{mclr_forward.1} parent=1 // pred_check
      _
    $region19: #{mclr_forward.1} parent=1 // pred_check_branch
      %291 = sbr.rel (0) target = $region21
    $region20: #{mclr_forward.1} parent=1 // pred_region
      %293 = dma.done [#allocation3], 128
    $region21: #{mclr_forward.1} parent=1 // pred_fallthru
      _
    %294 = vsyncpa [#allocation3], 1

</llo_original>
